<compile_context>
chip_gen: v7x
topology: tpu7x:2x2x1
jax: 0.10.0
libtpu: 0.0.40
codegen_flags: <defaults>
</compile_context>

<pallas_src>
import functools

import jax
import jax.numpy as jnp
from jax.experimental import pallas as pl
from jax.experimental.pallas import tpu as pltpu


# ----------------------------- Fused Pallas kernel -----------------------------

def _fused_stack_kernel(x_ref, y_ref, w_ref, b_ref, o_ref, *, f1, f2, h):
    """(x, y) -> fuse-Linear -> Linear+ReLU -> Linear, all in one kernel.

    w_ref is the packed bf16 weight slab, rows:
        [0      : f1       ) -> Wx   (f1, N)
        [f1     : f1+f2    ) -> Wy   (f2, N)
        [f1+f2  : f1+f2+h  ) -> W1   (h,  N)
        [f1+f2+h: f1+f2+2h ) -> W2   (h,  N)
    b_ref is the packed f32 bias array, rows 0/1/2 = b0/b1/b2.
    """
    r1 = f1
    r2 = f1 + f2
    r3 = r2 + h
    r4 = r3 + h
    wdt = w_ref.dtype  # bf16

    b = b_ref[...]  # (3, N) f32, single vreg-tile; sliced below (cheap)

    # Layer 0 (multi-input fuse): two K-slab matmuls, f32 accumulate.
    # No lane concat -> no XLU relayout; weight row-slices are tile-aligned.
    h0 = (jnp.dot(x_ref[...].astype(wdt), w_ref[0:r1, :],
                  preferred_element_type=jnp.float32)
          + jnp.dot(y_ref[...].astype(wdt), w_ref[r1:r2, :],
                    preferred_element_type=jnp.float32)
          + b[0:1, :])

    # Layer 1: Linear + ReLU (f32 epilogue).
    h1 = jnp.dot(h0.astype(wdt), w_ref[r2:r3, :],
                 preferred_element_type=jnp.float32) + b[1:2, :]
    h1 = jnp.maximum(h1, 0.0)

    # Layer 2: Linear.
    h2 = jnp.dot(h1.astype(wdt), w_ref[r3:r4, :],
                 preferred_element_type=jnp.float32) + b[2:3, :]

    o_ref[...] = h2.astype(o_ref.dtype)


def _vmem_spec():
    # Whole-array operand resident in VMEM; no grid, no pipelining.
    return pl.BlockSpec(memory_space=pltpu.VMEM)


def fused_stack(x, y, w_packed, b_packed, *, f1, f2, h, out):
    """One pallas_call for the whole 3-layer stack (4 operands, no grid)."""
    B = x.shape[0]
    kernel = functools.partial(_fused_stack_kernel, f1=f1, f2=f2, h=h)

    flops = 2 * B * ((f1 + f2) * h + h * h + h * out)
    bytes_accessed = (
        w_packed.size * w_packed.dtype.itemsize
        + b_packed.size * b_packed.dtype.itemsize
        + x.size * x.dtype.itemsize
        + y.size * y.dtype.itemsize
        + B * out * 4)

    return pl.pallas_call(
        kernel,
        out_shape=jax.ShapeDtypeStruct((B, out), jnp.float32),
        in_specs=[_vmem_spec() for _ in range(4)],
        out_specs=_vmem_spec(),
        cost_estimate=pl.CostEstimate(flops=flops, transcendentals=0,
                                      bytes_accessed=bytes_accessed),
    )(x, y, w_packed, b_packed)


# ----------------------- MultiInputSequential container -----------------------

class MultiInputSequential:
    """JAX/Pallas port of gbdsim.utils.modules.MultiInputSequential.

    Pure control-flow container: each layer is a callable; if the running
    value is a tuple it is unpacked into positional arguments.
    """

    def __init__(self, *layers):
        self.layers = list(layers)

    def __call__(self, *inputs):
        x = inputs
        for layer in self.layers:
            if isinstance(x, tuple):
                x = layer(*x)
            else:
                x = layer(x)
        return x


# ------------------------------ Example layer ------------------------------

class FusedStack:
    """Multi-input layer: (x, y) -> fuse -> Linear+ReLU -> Linear, one kernel.

    All weights are packed host-side (one-time) into a single bf16 slab and
    all biases into a single f32 array, so the kernel takes only 4 operands.
    Precision contract: bf16 MXU inputs, f32 accumulation, f32 epilogue/output
    (results drift ~1e-2 from an all-f32 PyTorch stack).
    """

    def __init__(self, wx, wy, b0, w1, b1, w2, b2):
        f1, n0 = wx.shape
        f2, n0b = wy.shape
        h, n1 = w1.shape
        h2, out = w2.shape
        assert n0 == n0b == h == n1 == h2 == out, (
            "weight/bias slab packing requires a uniform width (H == OUT)")
        self.f1, self.f2, self.h, self.out = f1, f2, h, out
        # Row order here (wx, wy, w1, w2) must match the kernel's static
        # row-slice offsets -- asserted by construction of _fused_stack_kernel.
        self.w_packed = jnp.concatenate([wx, wy, w1, w2],
                                        axis=0).astype(jnp.bfloat16)
        self.b_packed = jnp.concatenate(
            [b0.reshape(1, -1), b1.reshape(1, -1), b2.reshape(1, -1)],
            axis=0).astype(jnp.float32)

    def __call__(self, x, y):
        return fused_stack(x, y, self.w_packed, self.b_packed,
                           f1=self.f1, f2=self.f2, h=self.h, out=self.out)


# ----------------------------------- Main -----------------------------------

if __name__ == "__main__":
    key = jax.random.PRNGKey(0)
    kx, ky, k1, k2, k3, k4, kb1, kb2, kb3 = jax.random.split(key, 9)

    # Batched call: the gbdsim loop should stack its B=8 requests so one
    # pallas_call sees hundreds of rows (amortizes launch + weight DMA and
    # fills MXU M).  Activations at B=256 are still only ~160 KiB.
    B, F1, F2, H, OUT = 256, 32, 32, 128, 128
    dtype = jnp.float32

    x = jax.random.normal(kx, (B, F1), dtype)
    y = jax.random.normal(ky, (B, F2), dtype)

    wx = 0.1 * jax.random.normal(k1, (F1, H), dtype)
    wy = 0.1 * jax.random.normal(k2, (F2, H), dtype)
    b0 = 0.1 * jax.random.normal(kb1, (1, H), dtype)

    w1 = 0.1 * jax.random.normal(k3, (H, H), dtype)
    b1 = 0.1 * jax.random.normal(kb2, (1, H), dtype)

    w2 = 0.1 * jax.random.normal(k4, (H, OUT), dtype)
    b2 = 0.1 * jax.random.normal(kb3, (1, OUT), dtype)

    layer = FusedStack(wx, wy, b0, w1, b1, w2, b2)
    model = MultiInputSequential(layer)   # (x, y) tuple unpacked into the layer

    out = model(x, y)
    out = jax.block_until_ready(out)

    # Pure-JAX reference with the same precision contract and the same
    # two-dot layer-0 structure (bf16 operands, f32 accumulate).
    bf = jnp.bfloat16
    ref = (jnp.dot(x.astype(bf), wx.astype(bf),
                   preferred_element_type=jnp.float32)
           + jnp.dot(y.astype(bf), wy.astype(bf),
                     preferred_element_type=jnp.float32)
           + b0)
    ref = jnp.maximum(
        jnp.dot(ref.astype(bf), w1.astype(bf),
                preferred_element_type=jnp.float32) + b1, 0.0)
    ref = jnp.dot(ref.astype(bf), w2.astype(bf),
                  preferred_element_type=jnp.float32) + b2

    assert out.shape == (B, OUT)
    assert out.dtype == jnp.float32
    assert jnp.allclose(out, ref, atol=1e-2, rtol=1e-2), (
        float(jnp.max(jnp.abs(out - ref))))

    print("KERNEL_OK")
</pallas_src>

<mosaic_0001>
module attributes {stable_mosaic.version = 11 : i64} {
  func.func @_fused_stack_kernel(%arg0: memref<256x32xf32, #tpu.memory_space<vmem>>, %arg1: memref<256x32xf32, #tpu.memory_space<vmem>>, %arg2: memref<320x128xbf16, #tpu.memory_space<vmem>>, %arg3: memref<3x128xf32, #tpu.memory_space<vmem>>, %arg4: memref<256x128xf32, #tpu.memory_space<vmem>>) attributes {dimension_semantics = [], scalar_prefetch = 0 : i64, scratch_operands = 0 : i64, tpu.core_type = #tpu.core_type<tc>} {
    %c0 = arith.constant 0 : index
    %c0_0 = arith.constant 0 : index
    %0 = vector.load %arg3[%c0, %c0_0] : memref<3x128xf32, #tpu.memory_space<vmem>>, vector<3x128xf32>
    %c0_1 = arith.constant 0 : index
    %c0_2 = arith.constant 0 : index
    %1 = vector.load %arg0[%c0_1, %c0_2] : memref<256x32xf32, #tpu.memory_space<vmem>>, vector<256x32xf32>
    %2 = arith.truncf %1 : vector<256x32xf32> to vector<256x32xbf16>
    %c0_3 = arith.constant 0 : index
    %c0_4 = arith.constant 0 : index
    %3 = vector.load %arg2[%c0_3, %c0_4] : memref<320x128xbf16, #tpu.memory_space<vmem>>, vector<32x128xbf16>
    %cst = arith.constant dense<0.000000e+00> : vector<256x128xf32>
    %4 = tpu.matmul %2, %3, %cst {dimension_numbers = #tpu.dot_dimension_numbers<[1], [0], [0], [1], [0, 0, 1, 1], [], []>} : vector<256x32xbf16>, vector<32x128xbf16>, vector<256x128xf32> -> vector<256x128xf32>
    %c0_5 = arith.constant 0 : index
    %c0_6 = arith.constant 0 : index
    %5 = vector.load %arg1[%c0_5, %c0_6] : memref<256x32xf32, #tpu.memory_space<vmem>>, vector<256x32xf32>
    %6 = arith.truncf %5 : vector<256x32xf32> to vector<256x32xbf16>
    %c32 = arith.constant 32 : index
    %c0_7 = arith.constant 0 : index
    %7 = vector.load %arg2[%c32, %c0_7] : memref<320x128xbf16, #tpu.memory_space<vmem>>, vector<32x128xbf16>
    %cst_8 = arith.constant dense<0.000000e+00> : vector<256x128xf32>
    %8 = tpu.matmul %6, %7, %cst_8 {dimension_numbers = #tpu.dot_dimension_numbers<[1], [0], [0], [1], [0, 0, 1, 1], [], []>} : vector<256x32xbf16>, vector<32x128xbf16>, vector<256x128xf32> -> vector<256x128xf32>
    %9 = arith.addf %4, %8 : vector<256x128xf32>
    %10 = vector.extract_strided_slice %0 {offsets = [0, 0], sizes = [1, 128], strides = [1, 1]} : vector<3x128xf32> to vector<1x128xf32>
    %11 = vector.broadcast %10 : vector<1x128xf32> to vector<256x128xf32>
    %12 = arith.addf %9, %11 : vector<256x128xf32>
    %13 = arith.truncf %12 : vector<256x128xf32> to vector<256x128xbf16>
    %c64 = arith.constant 64 : index
    %c0_9 = arith.constant 0 : index
    %14 = vector.load %arg2[%c64, %c0_9] : memref<320x128xbf16, #tpu.memory_space<vmem>>, vector<128x128xbf16>
    %cst_10 = arith.constant dense<0.000000e+00> : vector<256x128xf32>
    %15 = tpu.matmul %13, %14, %cst_10 {dimension_numbers = #tpu.dot_dimension_numbers<[1], [0], [0], [1], [0, 0, 1, 1], [], []>} : vector<256x128xbf16>, vector<128x128xbf16>, vector<256x128xf32> -> vector<256x128xf32>
    %16 = vector.extract_strided_slice %0 {offsets = [1, 0], sizes = [1, 128], strides = [1, 1]} : vector<3x128xf32> to vector<1x128xf32>
    %17 = vector.broadcast %16 : vector<1x128xf32> to vector<256x128xf32>
    %18 = arith.addf %15, %17 : vector<256x128xf32>
    %cst_11 = arith.constant 0.000000e+00 : f32
    %19 = vector.broadcast %cst_11 : f32 to vector<256x128xf32>
    %20 = arith.maximumf %18, %19 : vector<256x128xf32>
    %21 = arith.truncf %20 : vector<256x128xf32> to vector<256x128xbf16>
    %c192 = arith.constant 192 : index
    %c0_12 = arith.constant 0 : index
    %22 = vector.load %arg2[%c192, %c0_12] : memref<320x128xbf16, #tpu.memory_space<vmem>>, vector<128x128xbf16>
    %cst_13 = arith.constant dense<0.000000e+00> : vector<256x128xf32>
    %23 = tpu.matmul %21, %22, %cst_13 {dimension_numbers = #tpu.dot_dimension_numbers<[1], [0], [0], [1], [0, 0, 1, 1], [], []>} : vector<256x128xbf16>, vector<128x128xbf16>, vector<256x128xf32> -> vector<256x128xf32>
    %24 = vector.extract_strided_slice %0 {offsets = [2, 0], sizes = [1, 128], strides = [1, 1]} : vector<3x128xf32> to vector<1x128xf32>
    %25 = vector.broadcast %24 : vector<1x128xf32> to vector<256x128xf32>
    %26 = arith.addf %23, %25 : vector<256x128xf32>
    %c0_14 = arith.constant 0 : index
    %c0_15 = arith.constant 0 : index
    %27 = vector.load %arg4[%c0_14, %c0_15] : memref<256x128xf32, #tpu.memory_space<vmem>>, vector<256x128xf32>
    tpu.vector_store %arg4[%c0_14, %c0_15], %26 {strides = array<i32>} : memref<256x128xf32, #tpu.memory_space<vmem>>, vector<256x128xf32>,
    return
  }
}

</mosaic_0001>

<llo_original>
// kernel: tpu_custom_call.1
$region0: #{tpu_custom_call.1}
  #allocation0 [shape = 'u32[]', space=smem, size = 0x4, offset = 0x4, fixed_abs, tag = 'smem constant byte address 0x4 - core index']
  #allocation1 [shape = 'u32[144,128]{1,0:T(1,128)}', space=vmem, size = 0x12000, scoped, tag = 'internal scratch']
  %s0 = inlined_call_operand.vmem [shape: f32[256,32], index: 0, kind: input, shape index: {}]
  %s1 = inlined_call_operand.vmem [shape: f32[256,32], index: 1, kind: input, shape index: {}]
  %s2 = inlined_call_operand.vmem [shape: bf16[320,128], index: 2, kind: input, shape index: {}]
  %s3 = inlined_call_operand.vmem [shape: f32[3,128], index: 3, kind: input, shape index: {}]
  %s4 = inlined_call_operand.hbm [shape: f32[256,128], index: 4, kind: output, shape index: {}]
  %s5 = sld [smem:[#allocation0]]
  $region26: #{tpu_custom_call.1} parent=0
    _
  %s7 = ssub.s32 1, %s5
  %s8 = scalar_select 0, %s7, %s5
  $region1: #{tpu_custom_call.1} parent=0
    #allocation2 [shape = 'u8[131072]{0}', space=vmem, size = 0x20000, scoped, tag = 'output window, operand 0, single buffered']
    #allocation3 [shape = 's32[1]{0}', space=sflag, size = 0x4, scoped, tag = 'scoped memory for tpu_custom_call.1']
    %9 = vsyncpa [#allocation3], 0
    // Predicated region
    $region2: #{tpu_custom_call.1} parent=1 // pred_check
      _
    $region3: #{tpu_custom_call.1} parent=1 // pred_check_branch
      %11 = sbr.rel (0) target = $region5
    $region4: #{tpu_custom_call.1} parent=1 // pred_region
      _
    $region5: #{tpu_custom_call.1} parent=1 // pred_fallthru
      _
    // Predicated region
    $region6: #{tpu_custom_call.1} parent=1 // pred_check
      _
    $region7: #{tpu_custom_call.1} parent=1 // pred_check_branch
      %13 = sbr.rel (0) target = $region9
    $region8: #{tpu_custom_call.1} parent=1 // pred_region
      _
    $region9: #{tpu_custom_call.1} parent=1 // pred_fallthru
      _
    // Predicated region
    $region10: #{tpu_custom_call.1} parent=1 // pred_check
      _
    $region11: #{tpu_custom_call.1} parent=1 // pred_check_branch
      %15 = sbr.rel (0) target = $region13
    $region12: #{tpu_custom_call.1} parent=1 // pred_region
      _
    $region13: #{tpu_custom_call.1} parent=1 // pred_fallthru
      _
    // Predicated region
    $region14: #{tpu_custom_call.1} parent=1 // pred_check
      _
    $region15: #{tpu_custom_call.1} parent=1 // pred_check_branch
      %17 = sbr.rel (0) target = $region17
    $region16: #{tpu_custom_call.1} parent=1 // pred_region
      _
    $region17: #{tpu_custom_call.1} parent=1 // pred_fallthru
      _
    %v19 = vld [vmem:[%s3] sm:$0x7]
    %v20 = vld [vmem:[%s0] sm:$0xff]
    %v21 = vld [vmem:[%s0 + $0x8] sm:$0xff]
    %v22 = vld [vmem:[%s0 + $0x10] sm:$0xff]
    %v23 = vld [vmem:[%s0 + $0x18] sm:$0xff]
    %v24 = vld [vmem:[%s0 + $0x20] sm:$0xff]
    %v25 = vld [vmem:[%s0 + $0x28] sm:$0xff]
    %v26 = vld [vmem:[%s0 + $0x30] sm:$0xff]
    %v27 = vld [vmem:[%s0 + $0x38] sm:$0xff]
    %v28 = vld [vmem:[%s0 + $0x40] sm:$0xff]
    %v29 = vld [vmem:[%s0 + $0x48] sm:$0xff]
    %v30 = vld [vmem:[%s0 + $0x50] sm:$0xff]
    %v31 = vld [vmem:[%s0 + $0x58] sm:$0xff]
    %v32 = vld [vmem:[%s0 + $0x60] sm:$0xff]
    %v33 = vld [vmem:[%s0 + $0x68] sm:$0xff]
    %v34 = vld [vmem:[%s0 + $0x70] sm:$0xff]
    %v35 = vld [vmem:[%s0 + $0x78] sm:$0xff]
    %v36 = vld [vmem:[%s0 + $0x80] sm:$0xff]
    %v37 = vld [vmem:[%s0 + $0x88] sm:$0xff]
    %v38 = vld [vmem:[%s0 + $0x90] sm:$0xff]
    %v39 = vld [vmem:[%s0 + $0x98] sm:$0xff]
    %v40 = vld [vmem:[%s0 + $0xa0] sm:$0xff]
    %v41 = vld [vmem:[%s0 + $0xa8] sm:$0xff]
    %v42 = vld [vmem:[%s0 + $0xb0] sm:$0xff]
    %v43 = vld [vmem:[%s0 + $0xb8] sm:$0xff]
    %v44 = vld [vmem:[%s0 + $0xc0] sm:$0xff]
    %v45 = vld [vmem:[%s0 + $0xc8] sm:$0xff]
    %v46 = vld [vmem:[%s0 + $0xd0] sm:$0xff]
    %v47 = vld [vmem:[%s0 + $0xd8] sm:$0xff]
    %v48 = vld [vmem:[%s0 + $0xe0] sm:$0xff]
    %v49 = vld [vmem:[%s0 + $0xe8] sm:$0xff]
    %v50 = vld [vmem:[%s0 + $0xf0] sm:$0xff]
    %v51 = vld [vmem:[%s0 + $0xf8] sm:$0xff]
    %v52 = vpack.c.bf16 %v21, %v20
    %v53 = vpack.c.bf16 %v23, %v22
    %v54 = vpack.c.bf16 %v25, %v24
    %v55 = vpack.c.bf16 %v27, %v26
    %v56 = vpack.c.bf16 %v29, %v28
    %v57 = vpack.c.bf16 %v31, %v30
    %v58 = vpack.c.bf16 %v33, %v32
    %v59 = vpack.c.bf16 %v35, %v34
    %v60 = vpack.c.bf16 %v37, %v36
    %v61 = vpack.c.bf16 %v39, %v38
    %v62 = vpack.c.bf16 %v41, %v40
    %v63 = vpack.c.bf16 %v43, %v42
    %v64 = vpack.c.bf16 %v45, %v44
    %v65 = vpack.c.bf16 %v47, %v46
    %v66 = vpack.c.bf16 %v49, %v48
    %v67 = vpack.c.bf16 %v51, %v50
    %v68 = vld [vmem:[%s2] sm:$0xf]
    %v69 = vld [vmem:[%s2 + $0x4] sm:$0xf]
    %v70 = vld [vmem:[%s2 + $0x8] sm:$0xf]
    %v71 = vld [vmem:[%s2 + $0xc] sm:$0xf]
    %v72 = vld [vmem:[%s1] sm:$0xff]
    %v73 = vld [vmem:[%s1 + $0x8] sm:$0xff]
    %v74 = vld [vmem:[%s1 + $0x10] sm:$0xff]
    %v75 = vld [vmem:[%s1 + $0x18] sm:$0xff]
    %v76 = vld [vmem:[%s1 + $0x20] sm:$0xff]
    %v77 = vld [vmem:[%s1 + $0x28] sm:$0xff]
    %v78 = vld [vmem:[%s1 + $0x30] sm:$0xff]
    %v79 = vld [vmem:[%s1 + $0x38] sm:$0xff]
    %v80 = vld [vmem:[%s1 + $0x40] sm:$0xff]
    %v81 = vld [vmem:[%s1 + $0x48] sm:$0xff]
    %v82 = vld [vmem:[%s1 + $0x50] sm:$0xff]
    %v83 = vld [vmem:[%s1 + $0x58] sm:$0xff]
    %v84 = vld [vmem:[%s1 + $0x60] sm:$0xff]
    %v85 = vld [vmem:[%s1 + $0x68] sm:$0xff]
    %v86 = vld [vmem:[%s1 + $0x70] sm:$0xff]
    %v87 = vld [vmem:[%s1 + $0x78] sm:$0xff]
    %v88 = vld [vmem:[%s1 + $0x80] sm:$0xff]
    %v89 = vld [vmem:[%s1 + $0x88] sm:$0xff]
    %v90 = vld [vmem:[%s1 + $0x90] sm:$0xff]
    %v91 = vld [vmem:[%s1 + $0x98] sm:$0xff]
    %v92 = vld [vmem:[%s1 + $0xa0] sm:$0xff]
    %v93 = vld [vmem:[%s1 + $0xa8] sm:$0xff]
    %v94 = vld [vmem:[%s1 + $0xb0] sm:$0xff]
    %v95 = vld [vmem:[%s1 + $0xb8] sm:$0xff]
    %v96 = vld [vmem:[%s1 + $0xc0] sm:$0xff]
    %v97 = vld [vmem:[%s1 + $0xc8] sm:$0xff]
    %v98 = vld [vmem:[%s1 + $0xd0] sm:$0xff]
    %v99 = vld [vmem:[%s1 + $0xd8] sm:$0xff]
    %v100 = vld [vmem:[%s1 + $0xe0] sm:$0xff]
    %v101 = vld [vmem:[%s1 + $0xe8] sm:$0xff]
    %v102 = vld [vmem:[%s1 + $0xf0] sm:$0xff]
    %v103 = vld [vmem:[%s1 + $0xf8] sm:$0xff]
    %v104 = vpack.c.bf16 %v73, %v72
    %v105 = vpack.c.bf16 %v75, %v74
    %v106 = vpack.c.bf16 %v77, %v76
    %v107 = vpack.c.bf16 %v79, %v78
    %v108 = vpack.c.bf16 %v81, %v80
    %v109 = vpack.c.bf16 %v83, %v82
    %v110 = vpack.c.bf16 %v85, %v84
    %v111 = vpack.c.bf16 %v87, %v86
    %v112 = vpack.c.bf16 %v89, %v88
    %v113 = vpack.c.bf16 %v91, %v90
    %v114 = vpack.c.bf16 %v93, %v92
    %v115 = vpack.c.bf16 %v95, %v94
    %v116 = vpack.c.bf16 %v97, %v96
    %v117 = vpack.c.bf16 %v99, %v98
    %v118 = vpack.c.bf16 %v101, %v100
    %v119 = vpack.c.bf16 %v103, %v102
    %v120 = vld [vmem:[%s2 + $0x10] sm:$0xf]
    %v121 = vld [vmem:[%s2 + $0x14] sm:$0xf]
    %v122 = vld [vmem:[%s2 + $0x18] sm:$0xf]
    %v123 = vld [vmem:[%s2 + $0x1c] sm:$0xf]
    %v128 = vunpack.c.l.b16 %v120
    %v129 = vunpack.c.l.b16 %v121
    %v130 = vunpack.c.l.b16 %v122
    %v131 = vunpack.c.l.b16 %v123
    %v132 = vpack.c.b16 %v129, %v128
    %v133 = vpack.c.b16 %v131, %v130
    %vm136 = vcmask 261120
    %v138 = vsel %vm136, %v104, 0
    %v141 = vsel %vm136, %v105, 0
    %v144 = vsel %vm136, %v106, 0
    %v147 = vsel %vm136, %v107, 0
    %v150 = vsel %vm136, %v108, 0
    %v153 = vsel %vm136, %v109, 0
    %v156 = vsel %vm136, %v110, 0
    %v159 = vsel %vm136, %v111, 0
    %v162 = vsel %vm136, %v112, 0
    %v165 = vsel %vm136, %v113, 0
    %v168 = vsel %vm136, %v114, 0
    %v171 = vsel %vm136, %v115, 0
    %v174 = vsel %vm136, %v116, 0
    %v177 = vsel %vm136, %v117, 0
    %v180 = vsel %vm136, %v118, 0
    %v183 = vsel %vm136, %v119, 0
    %185 = vmatprep.subr.bf16.mxu0 0
    %186 = vmatpush1.bf16.msra.mxu0 %v132
    %187 = vmatprep.subr.bf16.mxu0 0
    %188 = vmatpush1.bf16.msra.mxu0 %v133
    %189 = vmatprep.subr.bf16.mxu0 0
    %190 = vmatpush1.bf16.msra.mxu0 0
    %191 = vmatprep.subr.bf16.mxu0 0
    %192 = vmatpush1.bf16.msra.mxu0 0
    %193 = vmatprep.subr.bf16.mxu0 0
    %194 = vmatpush1.bf16.msra.mxu0 0
    %195 = vmatprep.subr.bf16.mxu0 0
    %196 = vmatpush1.bf16.msra.mxu0 0
    %197 = vmatprep.subr.bf16.mxu0 0
    %198 = vmatpush1.bf16.msra.mxu0 0
    %199 = vmatprep.subr.bf16.mxu0 0
    %200 = vmatpush1.bf16.msra.mxu0 0
    %201 = vmatprep.subr.bf16.mxu0 0
    %202 = vmatpush1.bf16.msra.mxu0 0
    %203 = vmatprep.subr.bf16.mxu0 0
    %204 = vmatpush1.bf16.msra.mxu0 0
    %205 = vmatprep.subr.bf16.mxu0 0
    %206 = vmatpush1.bf16.msra.mxu0 0
    %207 = vmatprep.subr.bf16.mxu0 0
    %208 = vmatpush1.bf16.msra.mxu0 0
    %209 = vmatprep.subr.bf16.mxu0 0
    %210 = vmatpush1.bf16.msra.mxu0 0
    %211 = vmatprep.subr.bf16.mxu0 0
    %212 = vmatpush1.bf16.msra.mxu0 0
    %213 = vmatprep.subr.bf16.mxu0 0
    %214 = vmatpush1.bf16.msra.mxu0 0
    %215 = vmatprep.subr.bf16.mxu0 0
    %216 = vmatpush1.bf16.msra.mxu0 0
    %217 = vmatprep.mubr.bf16.mxu0 0
    %218 = vmatmul.mubr.bf16.gmra.mrb[0].mxu0 %v138
    %v219 = vpop.f32.mrb[0].mxu0
    %v220 = vadd.f32 0.0, %v219
    %v221 = vpop.f32.mrb[0].mxu0
    %v222 = vpop.f32.mrb[0].mxu0
    %v223 = vadd.f32 0.0, %v222
    %v224 = vpop.f32.mrb[0].mxu0
    %225 = vmatprep.mubr.bf16.mxu0 0
    %226 = vmatmul.mubr.bf16.gmra.mrb[0].mxu0 %v141
    %v227 = vpop.f32.mrb[0].mxu0
    %v228 = vadd.f32 0.0, %v227
    %v229 = vpop.f32.mrb[0].mxu0
    %v230 = vpop.f32.mrb[0].mxu0
    %v231 = vadd.f32 0.0, %v230
    %v232 = vpop.f32.mrb[0].mxu0
    %233 = vmatprep.mubr.bf16.mxu0 0
    %234 = vmatmul.mubr.bf16.gmra.mrb[0].mxu0 %v144
    %v235 = vpop.f32.mrb[0].mxu0
    %v236 = vadd.f32 0.0, %v235
    %v237 = vpop.f32.mrb[0].mxu0
    %v238 = vpop.f32.mrb[0].mxu0
    %v239 = vadd.f32 0.0, %v238
    %v240 = vpop.f32.mrb[0].mxu0
    %241 = vmatprep.mubr.bf16.mxu0 0
    %242 = vmatmul.mubr.bf16.gmra.mrb[0].mxu0 %v147
    %v243 = vpop.f32.mrb[0].mxu0
    %v244 = vadd.f32 0.0, %v243
    %v245 = vpop.f32.mrb[0].mxu0
    %v246 = vpop.f32.mrb[0].mxu0
    %v247 = vadd.f32 0.0, %v246
    %v248 = vpop.f32.mrb[0].mxu0
    %249 = vmatprep.mubr.bf16.mxu0 0
    %250 = vmatmul.mubr.bf16.gmra.mrb[0].mxu0 %v150
    %v251 = vpop.f32.mrb[0].mxu0
    %v252 = vadd.f32 0.0, %v251
    %v253 = vpop.f32.mrb[0].mxu0
    %v254 = vpop.f32.mrb[0].mxu0
    %v255 = vadd.f32 0.0, %v254
    %v256 = vpop.f32.mrb[0].mxu0
    %257 = vmatprep.mubr.bf16.mxu0 0
    %258 = vmatmul.mubr.bf16.gmra.mrb[0].mxu0 %v153
    %v259 = vpop.f32.mrb[0].mxu0
    %v260 = vadd.f32 0.0, %v259
    %v261 = vpop.f32.mrb[0].mxu0
    %v262 = vpop.f32.mrb[0].mxu0
    %v263 = vadd.f32 0.0, %v262
    %v264 = vpop.f32.mrb[0].mxu0
    %265 = vmatprep.mubr.bf16.mxu0 0
    %266 = vmatmul.mubr.bf16.gmra.mrb[0].mxu0 %v156
    %v267 = vpop.f32.mrb[0].mxu0
    %v268 = vadd.f32 0.0, %v267
    %v269 = vpop.f32.mrb[0].mxu0
    %v270 = vpop.f32.mrb[0].mxu0
    %v271 = vadd.f32 0.0, %v270
    %v272 = vpop.f32.mrb[0].mxu0
    %273 = vmatprep.mubr.bf16.mxu0 0
    %274 = vmatmul.mubr.bf16.gmra.mrb[0].mxu0 %v159
    %v275 = vpop.f32.mrb[0].mxu0
    %v276 = vadd.f32 0.0, %v275
    %v277 = vpop.f32.mrb[0].mxu0
    %v278 = vpop.f32.mrb[0].mxu0
    %v279 = vadd.f32 0.0, %v278
    %v280 = vpop.f32.mrb[0].mxu0
    %281 = vmatprep.mubr.bf16.mxu0 0
    %282 = vmatmul.mubr.bf16.gmra.mrb[0].mxu0 %v162
    %v283 = vpop.f32.mrb[0].mxu0
    %v284 = vadd.f32 0.0, %v283
    %v285 = vpop.f32.mrb[0].mxu0
    %v286 = vpop.f32.mrb[0].mxu0
    %v287 = vadd.f32 0.0, %v286
    %v288 = vpop.f32.mrb[0].mxu0
    %289 = vmatprep.mubr.bf16.mxu0 0
    %290 = vmatmul.mubr.bf16.gmra.mrb[0].mxu0 %v165
    %v291 = vpop.f32.mrb[0].mxu0
    %v292 = vadd.f32 0.0, %v291
    %v293 = vpop.f32.mrb[0].mxu0
    %v294 = vpop.f32.mrb[0].mxu0
    %v295 = vadd.f32 0.0, %v294
    %v296 = vpop.f32.mrb[0].mxu0
    %297 = vmatprep.mubr.bf16.mxu0 0
    %298 = vmatmul.mubr.bf16.gmra.mrb[0].mxu0 %v168
    %v299 = vpop.f32.mrb[0].mxu0
    %v300 = vadd.f32 0.0, %v299
    %v301 = vpop.f32.mrb[0].mxu0
    %v302 = vpop.f32.mrb[0].mxu0
    %v303 = vadd.f32 0.0, %v302
    %v304 = vpop.f32.mrb[0].mxu0
    %305 = vmatprep.mubr.bf16.mxu0 0
    %306 = vmatmul.mubr.bf16.gmra.mrb[0].mxu0 %v171
    %v307 = vpop.f32.mrb[0].mxu0
    %v308 = vadd.f32 0.0, %v307
    %v309 = vpop.f32.mrb[0].mxu0
    %v310 = vpop.f32.mrb[0].mxu0
    %v311 = vadd.f32 0.0, %v310
    %v312 = vpop.f32.mrb[0].mxu0
    %313 = vmatprep.mubr.bf16.mxu0 0
    %314 = vmatmul.mubr.bf16.gmra.mrb[0].mxu0 %v174
    %v315 = vpop.f32.mrb[0].mxu0
    %v316 = vadd.f32 0.0, %v315
    %v317 = vpop.f32.mrb[0].mxu0
    %v318 = vpop.f32.mrb[0].mxu0
    %v319 = vadd.f32 0.0, %v318
    %v320 = vpop.f32.mrb[0].mxu0
    %321 = vmatprep.mubr.bf16.mxu0 0
    %322 = vmatmul.mubr.bf16.gmra.mrb[0].mxu0 %v177
    %v323 = vpop.f32.mrb[0].mxu0
    %v324 = vadd.f32 0.0, %v323
    %v325 = vpop.f32.mrb[0].mxu0
    %v326 = vpop.f32.mrb[0].mxu0
    %v327 = vadd.f32 0.0, %v326
    %v328 = vpop.f32.mrb[0].mxu0
    %329 = vmatprep.mubr.bf16.mxu0 0
    %330 = vmatmul.mubr.bf16.gmra.mrb[0].mxu0 %v180
    %v331 = vpop.f32.mrb[0].mxu0
    %v332 = vadd.f32 0.0, %v331
    %v333 = vpop.f32.mrb[0].mxu0
    %v334 = vpop.f32.mrb[0].mxu0
    %v335 = vadd.f32 0.0, %v334
    %v336 = vpop.f32.mrb[0].mxu0
    %337 = vmatprep.mubr.bf16.mxu0 0
    %338 = vmatmul.mubr.bf16.gmra.mrb[0].mxu0 %v183
    %v339 = vpop.f32.mrb[0].mxu0
    %v340 = vadd.f32 0.0, %v339
    %v341 = vpop.f32.mrb[0].mxu0
    %v342 = vpop.f32.mrb[0].mxu0
    %v343 = vadd.f32 0.0, %v342
    %v344 = vpop.f32.mrb[0].mxu0
    %345 = vdwg.mxu0
    %v350 = vunpack.c.l.b16 %v68
    %v351 = vunpack.c.l.b16 %v69
    %v352 = vunpack.c.l.b16 %v70
    %v353 = vunpack.c.l.b16 %v71
    %v354 = vpack.c.b16 %v351, %v350
    %v355 = vpack.c.b16 %v353, %v352
    %v359 = vsel %vm136, %v52, 0
    %v362 = vsel %vm136, %v53, 0
    %v365 = vsel %vm136, %v54, 0
    %v368 = vsel %vm136, %v55, 0
    %v371 = vsel %vm136, %v56, 0
    %v374 = vsel %vm136, %v57, 0
    %v377 = vsel %vm136, %v58, 0
    %v380 = vsel %vm136, %v59, 0
    %v383 = vsel %vm136, %v60, 0
    %v386 = vsel %vm136, %v61, 0
    %v389 = vsel %vm136, %v62, 0
    %v392 = vsel %vm136, %v63, 0
    %v395 = vsel %vm136, %v64, 0
    %v398 = vsel %vm136, %v65, 0
    %v401 = vsel %vm136, %v66, 0
    %v404 = vsel %vm136, %v67, 0
    %406 = vmatprep.subr.bf16.mxu0 0
    %407 = vmatpush1.bf16.msra.mxu0 %v354
    %408 = vmatprep.subr.bf16.mxu0 0
    %409 = vmatpush1.bf16.msra.mxu0 %v355
    %410 = vmatprep.subr.bf16.mxu0 0
    %411 = vmatpush1.bf16.msra.mxu0 0
    %412 = vmatprep.subr.bf16.mxu0 0
    %413 = vmatpush1.bf16.msra.mxu0 0
    %414 = vmatprep.subr.bf16.mxu0 0
    %415 = vmatpush1.bf16.msra.mxu0 0
    %416 = vmatprep.subr.bf16.mxu0 0
    %417 = vmatpush1.bf16.msra.mxu0 0
    %418 = vmatprep.subr.bf16.mxu0 0
    %419 = vmatpush1.bf16.msra.mxu0 0
    %420 = vmatprep.subr.bf16.mxu0 0
    %421 = vmatpush1.bf16.msra.mxu0 0
    %422 = vmatprep.subr.bf16.mxu0 0
    %423 = vmatpush1.bf16.msra.mxu0 0
    %424 = vmatprep.subr.bf16.mxu0 0
    %425 = vmatpush1.bf16.msra.mxu0 0
    %426 = vmatprep.subr.bf16.mxu0 0
    %427 = vmatpush1.bf16.msra.mxu0 0
    %428 = vmatprep.subr.bf16.mxu0 0
    %429 = vmatpush1.bf16.msra.mxu0 0
    %430 = vmatprep.subr.bf16.mxu0 0
    %431 = vmatpush1.bf16.msra.mxu0 0
    %432 = vmatprep.subr.bf16.mxu0 0
    %433 = vmatpush1.bf16.msra.mxu0 0
    %434 = vmatprep.subr.bf16.mxu0 0
    %435 = vmatpush1.bf16.msra.mxu0 0
    %436 = vmatprep.subr.bf16.mxu0 0
    %437 = vmatpush1.bf16.msra.mxu0 0
    %438 = vmatprep.mubr.bf16.mxu0 0
    %439 = vmatmul.mubr.bf16.gmra.mrb[0].mxu0 %v359
    %v440 = vpop.f32.mrb[0].mxu0
    %v441 = vadd.f32 %v220, %v440
    %v442 = vpop.f32.mrb[0].mxu0
    %v443 = vpop.f32.mrb[0].mxu0
    %v444 = vadd.f32 %v223, %v443
    %v445 = vpop.f32.mrb[0].mxu0
    %446 = vmatprep.mubr.bf16.mxu0 0
    %447 = vmatmul.mubr.bf16.gmra.mrb[0].mxu0 %v362
    %v448 = vpop.f32.mrb[0].mxu0
    %v449 = vadd.f32 %v228, %v448
    %v450 = vpop.f32.mrb[0].mxu0
    %v451 = vpop.f32.mrb[0].mxu0
    %v452 = vadd.f32 %v231, %v451
    %v453 = vpop.f32.mrb[0].mxu0
    %454 = vmatprep.mubr.bf16.mxu0 0
    %455 = vmatmul.mubr.bf16.gmra.mrb[0].mxu0 %v365
    %v456 = vpop.f32.mrb[0].mxu0
    %v457 = vadd.f32 %v236, %v456
    %v458 = vpop.f32.mrb[0].mxu0
    %v459 = vpop.f32.mrb[0].mxu0
    %v460 = vadd.f32 %v239, %v459
    %v461 = vpop.f32.mrb[0].mxu0
    %462 = vmatprep.mubr.bf16.mxu0 0
    %463 = vmatmul.mubr.bf16.gmra.mrb[0].mxu0 %v368
    %v464 = vpop.f32.mrb[0].mxu0
    %v465 = vadd.f32 %v244, %v464
    %v466 = vpop.f32.mrb[0].mxu0
    %v467 = vpop.f32.mrb[0].mxu0
    %v468 = vadd.f32 %v247, %v467
    %v469 = vpop.f32.mrb[0].mxu0
    %470 = vmatprep.mubr.bf16.mxu0 0
    %471 = vmatmul.mubr.bf16.gmra.mrb[0].mxu0 %v371
    %v472 = vpop.f32.mrb[0].mxu0
    %v473 = vadd.f32 %v252, %v472
    %v474 = vpop.f32.mrb[0].mxu0
    %v475 = vpop.f32.mrb[0].mxu0
    %v476 = vadd.f32 %v255, %v475
    %v477 = vpop.f32.mrb[0].mxu0
    %478 = vmatprep.mubr.bf16.mxu0 0
    %479 = vmatmul.mubr.bf16.gmra.mrb[0].mxu0 %v374
    %v480 = vpop.f32.mrb[0].mxu0
    %v481 = vadd.f32 %v260, %v480
    %v482 = vpop.f32.mrb[0].mxu0
    %v483 = vpop.f32.mrb[0].mxu0
    %v484 = vadd.f32 %v263, %v483
    %v485 = vpop.f32.mrb[0].mxu0
    %486 = vmatprep.mubr.bf16.mxu0 0
    %487 = vmatmul.mubr.bf16.gmra.mrb[0].mxu0 %v377
    %v488 = vpop.f32.mrb[0].mxu0
    %v489 = vadd.f32 %v268, %v488
    %v490 = vpop.f32.mrb[0].mxu0
    %v491 = vpop.f32.mrb[0].mxu0
    %v492 = vadd.f32 %v271, %v491
    %v493 = vpop.f32.mrb[0].mxu0
    %494 = vmatprep.mubr.bf16.mxu0 0
    %495 = vmatmul.mubr.bf16.gmra.mrb[0].mxu0 %v380
    %v496 = vpop.f32.mrb[0].mxu0
    %v497 = vadd.f32 %v276, %v496
    %v498 = vpop.f32.mrb[0].mxu0
    %v499 = vpop.f32.mrb[0].mxu0
    %v500 = vadd.f32 %v279, %v499
    %v501 = vpop.f32.mrb[0].mxu0
    %502 = vmatprep.mubr.bf16.mxu0 0
    %503 = vmatmul.mubr.bf16.gmra.mrb[0].mxu0 %v383
    %v504 = vpop.f32.mrb[0].mxu0
    %v505 = vadd.f32 %v284, %v504
    %v506 = vpop.f32.mrb[0].mxu0
    %v507 = vpop.f32.mrb[0].mxu0
    %v508 = vadd.f32 %v287, %v507
    %v509 = vpop.f32.mrb[0].mxu0
    %510 = vmatprep.mubr.bf16.mxu0 0
    %511 = vmatmul.mubr.bf16.gmra.mrb[0].mxu0 %v386
    %v512 = vpop.f32.mrb[0].mxu0
    %v513 = vadd.f32 %v292, %v512
    %v514 = vpop.f32.mrb[0].mxu0
    %v515 = vpop.f32.mrb[0].mxu0
    %v516 = vadd.f32 %v295, %v515
    %v517 = vpop.f32.mrb[0].mxu0
    %518 = vmatprep.mubr.bf16.mxu0 0
    %519 = vmatmul.mubr.bf16.gmra.mrb[0].mxu0 %v389
    %v520 = vpop.f32.mrb[0].mxu0
    %v521 = vadd.f32 %v300, %v520
    %v522 = vpop.f32.mrb[0].mxu0
    %v523 = vpop.f32.mrb[0].mxu0
    %v524 = vadd.f32 %v303, %v523
    %v525 = vpop.f32.mrb[0].mxu0
    %526 = vmatprep.mubr.bf16.mxu0 0
    %527 = vmatmul.mubr.bf16.gmra.mrb[0].mxu0 %v392
    %v528 = vpop.f32.mrb[0].mxu0
    %v529 = vadd.f32 %v308, %v528
    %v530 = vpop.f32.mrb[0].mxu0
    %v531 = vpop.f32.mrb[0].mxu0
    %v532 = vadd.f32 %v311, %v531
    %v533 = vpop.f32.mrb[0].mxu0
    %534 = vmatprep.mubr.bf16.mxu0 0
    %535 = vmatmul.mubr.bf16.gmra.mrb[0].mxu0 %v395
    %v536 = vpop.f32.mrb[0].mxu0
    %v537 = vadd.f32 %v316, %v536
    %v538 = vpop.f32.mrb[0].mxu0
    %v539 = vpop.f32.mrb[0].mxu0
    %v540 = vadd.f32 %v319, %v539
    %v541 = vpop.f32.mrb[0].mxu0
    %542 = vmatprep.mubr.bf16.mxu0 0
    %543 = vmatmul.mubr.bf16.gmra.mrb[0].mxu0 %v398
    %v544 = vpop.f32.mrb[0].mxu0
    %v545 = vadd.f32 %v324, %v544
    %v546 = vpop.f32.mrb[0].mxu0
    %v547 = vpop.f32.mrb[0].mxu0
    %v548 = vadd.f32 %v327, %v547
    %v549 = vpop.f32.mrb[0].mxu0
    %550 = vmatprep.mubr.bf16.mxu0 0
    %551 = vmatmul.mubr.bf16.gmra.mrb[0].mxu0 %v401
    %v552 = vpop.f32.mrb[0].mxu0
    %v553 = vadd.f32 %v332, %v552
    %v554 = vpop.f32.mrb[0].mxu0
    %v555 = vpop.f32.mrb[0].mxu0
    %v556 = vadd.f32 %v335, %v555
    %v557 = vpop.f32.mrb[0].mxu0
    %558 = vmatprep.mubr.bf16.mxu0 0
    %559 = vmatmul.mubr.bf16.gmra.mrb[0].mxu0 %v404
    %v560 = vpop.f32.mrb[0].mxu0
    %v561 = vadd.f32 %v340, %v560
    %v562 = vpop.f32.mrb[0].mxu0
    %v563 = vpop.f32.mrb[0].mxu0
    %v564 = vadd.f32 %v343, %v563
    %v565 = vpop.f32.mrb[0].mxu0
    %566 = vdwg.mxu0
    %v567 = vlaneseq
    %v568 = vshrl.u32 %v567, 7
    %v569 = vsub.s32 0, %v568
    %v570 = vrot.slane %v19, %v569
    %v571 = vadd.f32 %v441, %v570
    %v572 = vadd.f32 %v444, %v570
    %v573 = vadd.f32 %v449, %v570
    %v574 = vadd.f32 %v452, %v570
    %v575 = vadd.f32 %v457, %v570
    %v576 = vadd.f32 %v460, %v570
    %v577 = vadd.f32 %v465, %v570
    %v578 = vadd.f32 %v468, %v570
    %v579 = vadd.f32 %v473, %v570
    %v580 = vadd.f32 %v476, %v570
    %v581 = vadd.f32 %v481, %v570
    %v582 = vadd.f32 %v484, %v570
    %v583 = vadd.f32 %v489, %v570
    %v584 = vadd.f32 %v492, %v570
    %v585 = vadd.f32 %v497, %v570
    %v586 = vadd.f32 %v500, %v570
    %v587 = vadd.f32 %v505, %v570
    %v588 = vadd.f32 %v508, %v570
    %v589 = vadd.f32 %v513, %v570
    %v590 = vadd.f32 %v516, %v570
    %v591 = vadd.f32 %v521, %v570
    %v592 = vadd.f32 %v524, %v570
    %v593 = vadd.f32 %v529, %v570
    %v594 = vadd.f32 %v532, %v570
    %v595 = vadd.f32 %v537, %v570
    %v596 = vadd.f32 %v540, %v570
    %v597 = vadd.f32 %v545, %v570
    %v598 = vadd.f32 %v548, %v570
    %v599 = vadd.f32 %v553, %v570
    %v600 = vadd.f32 %v556, %v570
    %v601 = vadd.f32 %v561, %v570
    %v602 = vadd.f32 %v564, %v570
    %v603 = vpack.c.bf16 %v572, %v571
    %v604 = vpack.c.bf16 %v574, %v573
    %v605 = vpack.c.bf16 %v576, %v575
    %v606 = vpack.c.bf16 %v578, %v577
    %v607 = vpack.c.bf16 %v580, %v579
    %v608 = vpack.c.bf16 %v582, %v581
    %v609 = vpack.c.bf16 %v584, %v583
    %v610 = vpack.c.bf16 %v586, %v585
    %v611 = vpack.c.bf16 %v588, %v587
    %v612 = vpack.c.bf16 %v590, %v589
    %v613 = vpack.c.bf16 %v592, %v591
    %v614 = vpack.c.bf16 %v594, %v593
    %v615 = vpack.c.bf16 %v596, %v595
    %v616 = vpack.c.bf16 %v598, %v597
    %v617 = vpack.c.bf16 %v600, %v599
    %v618 = vpack.c.bf16 %v602, %v601
    %v619 = vld [vmem:[%s2 + $0x20] sm:$0xf]
    %v620 = vld [vmem:[%s2 + $0x24] sm:$0xf]
    %v621 = vld [vmem:[%s2 + $0x28] sm:$0xf]
    %v622 = vld [vmem:[%s2 + $0x2c] sm:$0xf]
    %v623 = vld [vmem:[%s2 + $0x30] sm:$0xf]
    %v624 = vld [vmem:[%s2 + $0x34] sm:$0xf]
    %v625 = vld [vmem:[%s2 + $0x38] sm:$0xf]
    %v626 = vld [vmem:[%s2 + $0x3c] sm:$0xf]
    %v627 = vld [vmem:[%s2 + $0x40] sm:$0xf]
    %v628 = vld [vmem:[%s2 + $0x44] sm:$0xf]
    %v629 = vld [vmem:[%s2 + $0x48] sm:$0xf]
    %v630 = vld [vmem:[%s2 + $0x4c] sm:$0xf]
    %v631 = vld [vmem:[%s2 + $0x50] sm:$0xf]
    %v632 = vld [vmem:[%s2 + $0x54] sm:$0xf]
    %v633 = vld [vmem:[%s2 + $0x58] sm:$0xf]
    %v634 = vld [vmem:[%s2 + $0x5c] sm:$0xf]
    %v635 = vlaneseq
    %v636 = vshrl.u32 %v635, 7
    %v637 = vsub.s32 1, %v636
    %v638 = vrot.slane %v19, %v637
    %v655 = vunpack.c.l.b16 %v619
    %v656 = vunpack.c.l.b16 %v620
    %v657 = vunpack.c.l.b16 %v621
    %v658 = vunpack.c.l.b16 %v622
    %v659 = vunpack.c.l.b16 %v623
    %v660 = vunpack.c.l.b16 %v624
    %v661 = vunpack.c.l.b16 %v625
    %v662 = vunpack.c.l.b16 %v626
    %v663 = vunpack.c.l.b16 %v627
    %v664 = vunpack.c.l.b16 %v628
    %v665 = vunpack.c.l.b16 %v629
    %v666 = vunpack.c.l.b16 %v630
    %v667 = vunpack.c.l.b16 %v631
    %v668 = vunpack.c.l.b16 %v632
    %v669 = vunpack.c.l.b16 %v633
    %v670 = vunpack.c.l.b16 %v634
    %v671 = vpack.c.b16 %v656, %v655
    %v672 = vpack.c.b16 %v658, %v657
    %v673 = vpack.c.b16 %v660, %v659
    %v674 = vpack.c.b16 %v662, %v661
    %v675 = vpack.c.b16 %v664, %v663
    %v676 = vpack.c.b16 %v666, %v665
    %v677 = vpack.c.b16 %v668, %v667
    %v678 = vpack.c.b16 %v670, %v669
    %687 = vmatprep.subr.bf16.mxu0 0
    %688 = vmatpush1.bf16.msra.mxu0 %v671
    %689 = vmatprep.subr.bf16.mxu0 0
    %690 = vmatpush1.bf16.msra.mxu0 %v672
    %691 = vmatprep.subr.bf16.mxu0 0
    %692 = vmatpush1.bf16.msra.mxu0 %v673
    %693 = vmatprep.subr.bf16.mxu0 0
    %694 = vmatpush1.bf16.msra.mxu0 %v674
    %695 = vmatprep.subr.bf16.mxu0 0
    %696 = vmatpush1.bf16.msra.mxu0 %v675
    %697 = vmatprep.subr.bf16.mxu0 0
    %698 = vmatpush1.bf16.msra.mxu0 %v676
    %699 = vmatprep.subr.bf16.mxu0 0
    %700 = vmatpush1.bf16.msra.mxu0 %v677
    %701 = vmatprep.subr.bf16.mxu0 0
    %702 = vmatpush1.bf16.msra.mxu0 %v678
    %703 = vmatprep.subr.bf16.mxu0 0
    %704 = vmatpush1.bf16.msra.mxu0 0
    %705 = vmatprep.subr.bf16.mxu0 0
    %706 = vmatpush1.bf16.msra.mxu0 0
    %707 = vmatprep.subr.bf16.mxu0 0
    %708 = vmatpush1.bf16.msra.mxu0 0
    %709 = vmatprep.subr.bf16.mxu0 0
    %710 = vmatpush1.bf16.msra.mxu0 0
    %711 = vmatprep.subr.bf16.mxu0 0
    %712 = vmatpush1.bf16.msra.mxu0 0
    %713 = vmatprep.subr.bf16.mxu0 0
    %714 = vmatpush1.bf16.msra.mxu0 0
    %715 = vmatprep.subr.bf16.mxu0 0
    %716 = vmatpush1.bf16.msra.mxu0 0
    %717 = vmatprep.subr.bf16.mxu0 0
    %718 = vmatpush1.bf16.msra.mxu0 0
    %719 = vmatprep.mubr.bf16.mxu0 0
    %720 = vmatmul.mubr.bf16.gmra.mrb[0].mxu0 %v603
    %v721 = vpop.f32.mrb[0].mxu0
    %v722 = vadd.f32 %v638, %v721
    %v723 = vpop.f32.mrb[0].mxu0
    %v724 = vpop.f32.mrb[0].mxu0
    %v725 = vadd.f32 %v638, %v724
    %v726 = vpop.f32.mrb[0].mxu0
    %727 = vmatprep.mubr.bf16.mxu0 0
    %728 = vmatmul.mubr.bf16.gmra.mrb[0].mxu0 %v604
    %v729 = vpop.f32.mrb[0].mxu0
    %v730 = vadd.f32 %v638, %v729
    %v731 = vpop.f32.mrb[0].mxu0
    %v732 = vpop.f32.mrb[0].mxu0
    %v733 = vadd.f32 %v638, %v732
    %v734 = vpop.f32.mrb[0].mxu0
    %735 = vmatprep.mubr.bf16.mxu0 0
    %736 = vmatmul.mubr.bf16.gmra.mrb[0].mxu0 %v605
    %v737 = vpop.f32.mrb[0].mxu0
    %v738 = vadd.f32 %v638, %v737
    %v739 = vpop.f32.mrb[0].mxu0
    %v740 = vpop.f32.mrb[0].mxu0
    %v741 = vadd.f32 %v638, %v740
    %v742 = vpop.f32.mrb[0].mxu0
    %743 = vmatprep.mubr.bf16.mxu0 0
    %744 = vmatmul.mubr.bf16.gmra.mrb[0].mxu0 %v606
    %v745 = vpop.f32.mrb[0].mxu0
    %v746 = vadd.f32 %v638, %v745
    %v747 = vpop.f32.mrb[0].mxu0
    %v748 = vpop.f32.mrb[0].mxu0
    %v749 = vadd.f32 %v638, %v748
    %v750 = vpop.f32.mrb[0].mxu0
    %751 = vmatprep.mubr.bf16.mxu0 0
    %752 = vmatmul.mubr.bf16.gmra.mrb[0].mxu0 %v607
    %v753 = vpop.f32.mrb[0].mxu0
    %v754 = vadd.f32 %v638, %v753
    %v755 = vpop.f32.mrb[0].mxu0
    %v756 = vpop.f32.mrb[0].mxu0
    %v757 = vadd.f32 %v638, %v756
    %v758 = vpop.f32.mrb[0].mxu0
    %759 = vmatprep.mubr.bf16.mxu0 0
    %760 = vmatmul.mubr.bf16.gmra.mrb[0].mxu0 %v608
    %v761 = vpop.f32.mrb[0].mxu0
    %v762 = vadd.f32 %v638, %v761
    %v763 = vpop.f32.mrb[0].mxu0
    %v764 = vpop.f32.mrb[0].mxu0
    %v765 = vadd.f32 %v638, %v764
    %v766 = vpop.f32.mrb[0].mxu0
    %767 = vmatprep.mubr.bf16.mxu0 0
    %768 = vmatmul.mubr.bf16.gmra.mrb[0].mxu0 %v609
    %v769 = vpop.f32.mrb[0].mxu0
    %v770 = vadd.f32 %v638, %v769
    %v771 = vpop.f32.mrb[0].mxu0
    %v772 = vpop.f32.mrb[0].mxu0
    %v773 = vadd.f32 %v638, %v772
    %v774 = vpop.f32.mrb[0].mxu0
    %775 = vmatprep.mubr.bf16.mxu0 0
    %776 = vmatmul.mubr.bf16.gmra.mrb[0].mxu0 %v610
    %v777 = vpop.f32.mrb[0].mxu0
    %v778 = vadd.f32 %v638, %v777
    %v779 = vpop.f32.mrb[0].mxu0
    %v780 = vpop.f32.mrb[0].mxu0
    %v781 = vadd.f32 %v638, %v780
    %v782 = vpop.f32.mrb[0].mxu0
    %783 = vmatprep.mubr.bf16.mxu0 0
    %784 = vmatmul.mubr.bf16.gmra.mrb[0].mxu0 %v611
    %v785 = vpop.f32.mrb[0].mxu0
    %v786 = vadd.f32 %v638, %v785
    %v787 = vpop.f32.mrb[0].mxu0
    %v788 = vpop.f32.mrb[0].mxu0
    %v789 = vadd.f32 %v638, %v788
    %v790 = vpop.f32.mrb[0].mxu0
    %791 = vmatprep.mubr.bf16.mxu0 0
    %792 = vmatmul.mubr.bf16.gmra.mrb[0].mxu0 %v612
    %v793 = vpop.f32.mrb[0].mxu0
    %v794 = vadd.f32 %v638, %v793
    %v795 = vpop.f32.mrb[0].mxu0
    %v796 = vpop.f32.mrb[0].mxu0
    %v797 = vadd.f32 %v638, %v796
    %v798 = vpop.f32.mrb[0].mxu0
    %799 = vmatprep.mubr.bf16.mxu0 0
    %800 = vmatmul.mubr.bf16.gmra.mrb[0].mxu0 %v613
    %v801 = vpop.f32.mrb[0].mxu0
    %v802 = vadd.f32 %v638, %v801
    %v803 = vpop.f32.mrb[0].mxu0
    %v804 = vpop.f32.mrb[0].mxu0
    %v805 = vadd.f32 %v638, %v804
    %v806 = vpop.f32.mrb[0].mxu0
    %807 = vmatprep.mubr.bf16.mxu0 0
    %808 = vmatmul.mubr.bf16.gmra.mrb[0].mxu0 %v614
    %v809 = vpop.f32.mrb[0].mxu0
    %v810 = vadd.f32 %v638, %v809
    %v811 = vpop.f32.mrb[0].mxu0
    %v812 = vpop.f32.mrb[0].mxu0
    %v813 = vadd.f32 %v638, %v812
    %v814 = vpop.f32.mrb[0].mxu0
    %815 = vmatprep.mubr.bf16.mxu0 0
    %816 = vmatmul.mubr.bf16.gmra.mrb[0].mxu0 %v615
    %v817 = vpop.f32.mrb[0].mxu0
    %v818 = vadd.f32 %v638, %v817
    %v819 = vpop.f32.mrb[0].mxu0
    %v820 = vpop.f32.mrb[0].mxu0
    %v821 = vadd.f32 %v638, %v820
    %v822 = vpop.f32.mrb[0].mxu0
    %823 = vmatprep.mubr.bf16.mxu0 0
    %824 = vmatmul.mubr.bf16.gmra.mrb[0].mxu0 %v616
    %v825 = vpop.f32.mrb[0].mxu0
    %v826 = vadd.f32 %v638, %v825
    %v827 = vpop.f32.mrb[0].mxu0
    %v828 = vpop.f32.mrb[0].mxu0
    %v829 = vadd.f32 %v638, %v828
    %v830 = vpop.f32.mrb[0].mxu0
    %831 = vmatprep.mubr.bf16.mxu0 0
    %832 = vmatmul.mubr.bf16.gmra.mrb[0].mxu0 %v617
    %v833 = vpop.f32.mrb[0].mxu0
    %v834 = vadd.f32 %v638, %v833
    %v835 = vpop.f32.mrb[0].mxu0
    %v836 = vpop.f32.mrb[0].mxu0
    %v837 = vadd.f32 %v638, %v836
    %v838 = vpop.f32.mrb[0].mxu0
    %839 = vmatprep.mubr.bf16.mxu0 0
    %840 = vmatmul.mubr.bf16.gmra.mrb[0].mxu0 %v618
    %v841 = vpop.f32.mrb[0].mxu0
    %v842 = vadd.f32 %v638, %v841
    %v843 = vpop.f32.mrb[0].mxu0
    %v844 = vpop.f32.mrb[0].mxu0
    %v845 = vadd.f32 %v638, %v844
    %v846 = vpop.f32.mrb[0].mxu0
    %847 = vdwg.mxu0
    %v848 = vmax.f32 %v722, 0.0
    %v849 = vmax.f32 %v725, 0.0
    %v850 = vmax.f32 %v730, 0.0
    %v851 = vmax.f32 %v733, 0.0
    %v852 = vmax.f32 %v738, 0.0
    %v853 = vmax.f32 %v741, 0.0
    %v854 = vmax.f32 %v746, 0.0
    %v855 = vmax.f32 %v749, 0.0
    %v856 = vmax.f32 %v754, 0.0
    %v857 = vmax.f32 %v757, 0.0
    %v858 = vmax.f32 %v762, 0.0
    %v859 = vmax.f32 %v765, 0.0
    %v860 = vmax.f32 %v770, 0.0
    %v861 = vmax.f32 %v773, 0.0
    %v862 = vmax.f32 %v778, 0.0
    %v863 = vmax.f32 %v781, 0.0
    %v864 = vmax.f32 %v786, 0.0
    %v865 = vmax.f32 %v789, 0.0
    %v866 = vmax.f32 %v794, 0.0
    %v867 = vmax.f32 %v797, 0.0
    %v868 = vmax.f32 %v802, 0.0
    %v869 = vmax.f32 %v805, 0.0
    %v870 = vmax.f32 %v810, 0.0
    %v871 = vmax.f32 %v813, 0.0
    %v872 = vmax.f32 %v818, 0.0
    %v873 = vmax.f32 %v821, 0.0
    %v874 = vmax.f32 %v826, 0.0
    %v875 = vmax.f32 %v829, 0.0
    %v876 = vmax.f32 %v834, 0.0
    %v877 = vmax.f32 %v837, 0.0
    %v878 = vmax.f32 %v842, 0.0
    %v879 = vmax.f32 %v845, 0.0
    %v880 = vpack.c.bf16 %v849, %v848
    %v881 = vpack.c.bf16 %v851, %v850
    %v882 = vpack.c.bf16 %v853, %v852
    %v883 = vpack.c.bf16 %v855, %v854
    %v884 = vpack.c.bf16 %v857, %v856
    %v885 = vpack.c.bf16 %v859, %v858
    %v886 = vpack.c.bf16 %v861, %v860
    %v887 = vpack.c.bf16 %v863, %v862
    %v888 = vpack.c.bf16 %v865, %v864
    %v889 = vpack.c.bf16 %v867, %v866
    %v890 = vpack.c.bf16 %v869, %v868
    %v891 = vpack.c.bf16 %v871, %v870
    %v892 = vpack.c.bf16 %v873, %v872
    %v893 = vpack.c.bf16 %v875, %v874
    %v894 = vpack.c.bf16 %v877, %v876
    %v895 = vpack.c.bf16 %v879, %v878
    %v896 = vld [vmem:[%s2 + $0x60] sm:$0xf]
    %v897 = vld [vmem:[%s2 + $0x64] sm:$0xf]
    %v898 = vld [vmem:[%s2 + $0x68] sm:$0xf]
    %v899 = vld [vmem:[%s2 + $0x6c] sm:$0xf]
    %v900 = vld [vmem:[%s2 + $0x70] sm:$0xf]
    %v901 = vld [vmem:[%s2 + $0x74] sm:$0xf]
    %v902 = vld [vmem:[%s2 + $0x78] sm:$0xf]
    %v903 = vld [vmem:[%s2 + $0x7c] sm:$0xf]
    %v904 = vld [vmem:[%s2 + $0x80] sm:$0xf]
    %v905 = vld [vmem:[%s2 + $0x84] sm:$0xf]
    %v906 = vld [vmem:[%s2 + $0x88] sm:$0xf]
    %v907 = vld [vmem:[%s2 + $0x8c] sm:$0xf]
    %v908 = vld [vmem:[%s2 + $0x90] sm:$0xf]
    %v909 = vld [vmem:[%s2 + $0x94] sm:$0xf]
    %v910 = vld [vmem:[%s2 + $0x98] sm:$0xf]
    %v911 = vld [vmem:[%s2 + $0x9c] sm:$0xf]
    %v912 = vlaneseq
    %v913 = vshrl.u32 %v912, 7
    %v914 = vsub.s32 2, %v913
    %v915 = vrot.slane %v19, %v914
    %v932 = vunpack.c.l.b16 %v896
    %v933 = vunpack.c.l.b16 %v897
    %v934 = vunpack.c.l.b16 %v898
    %v935 = vunpack.c.l.b16 %v899
    %v936 = vunpack.c.l.b16 %v900
    %v937 = vunpack.c.l.b16 %v901
    %v938 = vunpack.c.l.b16 %v902
    %v939 = vunpack.c.l.b16 %v903
    %v940 = vunpack.c.l.b16 %v904
    %v941 = vunpack.c.l.b16 %v905
    %v942 = vunpack.c.l.b16 %v906
    %v943 = vunpack.c.l.b16 %v907
    %v944 = vunpack.c.l.b16 %v908
    %v945 = vunpack.c.l.b16 %v909
    %v946 = vunpack.c.l.b16 %v910
    %v947 = vunpack.c.l.b16 %v911
    %v948 = vpack.c.b16 %v933, %v932
    %v949 = vpack.c.b16 %v935, %v934
    %v950 = vpack.c.b16 %v937, %v936
    %v951 = vpack.c.b16 %v939, %v938
    %v952 = vpack.c.b16 %v941, %v940
    %v953 = vpack.c.b16 %v943, %v942
    %v954 = vpack.c.b16 %v945, %v944
    %v955 = vpack.c.b16 %v947, %v946
    %964 = vmatprep.subr.bf16.mxu0 0
    %965 = vmatpush1.bf16.msra.mxu0 %v948
    %966 = vmatprep.subr.bf16.mxu0 0
    %967 = vmatpush1.bf16.msra.mxu0 %v949
    %968 = vmatprep.subr.bf16.mxu0 0
    %969 = vmatpush1.bf16.msra.mxu0 %v950
    %970 = vmatprep.subr.bf16.mxu0 0
    %971 = vmatpush1.bf16.msra.mxu0 %v951
    %972 = vmatprep.subr.bf16.mxu0 0
    %973 = vmatpush1.bf16.msra.mxu0 %v952
    %974 = vmatprep.subr.bf16.mxu0 0
    %975 = vmatpush1.bf16.msra.mxu0 %v953
    %976 = vmatprep.subr.bf16.mxu0 0
    %977 = vmatpush1.bf16.msra.mxu0 %v954
    %978 = vmatprep.subr.bf16.mxu0 0
    %979 = vmatpush1.bf16.msra.mxu0 %v955
    %980 = vmatprep.subr.bf16.mxu0 0
    %981 = vmatpush1.bf16.msra.mxu0 0
    %982 = vmatprep.subr.bf16.mxu0 0
    %983 = vmatpush1.bf16.msra.mxu0 0
    %984 = vmatprep.subr.bf16.mxu0 0
    %985 = vmatpush1.bf16.msra.mxu0 0
    %986 = vmatprep.subr.bf16.mxu0 0
    %987 = vmatpush1.bf16.msra.mxu0 0
    %988 = vmatprep.subr.bf16.mxu0 0
    %989 = vmatpush1.bf16.msra.mxu0 0
    %990 = vmatprep.subr.bf16.mxu0 0
    %991 = vmatpush1.bf16.msra.mxu0 0
    %992 = vmatprep.subr.bf16.mxu0 0
    %993 = vmatpush1.bf16.msra.mxu0 0
    %994 = vmatprep.subr.bf16.mxu0 0
    %995 = vmatpush1.bf16.msra.mxu0 0
    %996 = vmatprep.mubr.bf16.mxu0 0
    %997 = vmatmul.mubr.bf16.gmra.mrb[0].mxu0 %v880
    %v998 = vpop.f32.mrb[0].mxu0
    %v999 = vadd.f32 %v915, %v998
    %v1000 = vpop.f32.mrb[0].mxu0
    %v1001 = vpop.f32.mrb[0].mxu0
    %v1002 = vadd.f32 %v915, %v1001
    %v1003 = vpop.f32.mrb[0].mxu0
    %1004 = vmatprep.mubr.bf16.mxu0 0
    %1005 = vmatmul.mubr.bf16.gmra.mrb[0].mxu0 %v881
    %v1006 = vpop.f32.mrb[0].mxu0
    %v1007 = vadd.f32 %v915, %v1006
    %v1008 = vpop.f32.mrb[0].mxu0
    %v1009 = vpop.f32.mrb[0].mxu0
    %v1010 = vadd.f32 %v915, %v1009
    %v1011 = vpop.f32.mrb[0].mxu0
    %1012 = vmatprep.mubr.bf16.mxu0 0
    %1013 = vmatmul.mubr.bf16.gmra.mrb[0].mxu0 %v882
    %v1014 = vpop.f32.mrb[0].mxu0
    %v1015 = vadd.f32 %v915, %v1014
    %v1016 = vpop.f32.mrb[0].mxu0
    %v1017 = vpop.f32.mrb[0].mxu0
    %v1018 = vadd.f32 %v915, %v1017
    %v1019 = vpop.f32.mrb[0].mxu0
    %1020 = vmatprep.mubr.bf16.mxu0 0
    %1021 = vmatmul.mubr.bf16.gmra.mrb[0].mxu0 %v883
    %v1022 = vpop.f32.mrb[0].mxu0
    %v1023 = vadd.f32 %v915, %v1022
    %v1024 = vpop.f32.mrb[0].mxu0
    %v1025 = vpop.f32.mrb[0].mxu0
    %v1026 = vadd.f32 %v915, %v1025
    %v1027 = vpop.f32.mrb[0].mxu0
    %1028 = vmatprep.mubr.bf16.mxu0 0
    %1029 = vmatmul.mubr.bf16.gmra.mrb[0].mxu0 %v884
    %v1030 = vpop.f32.mrb[0].mxu0
    %v1031 = vadd.f32 %v915, %v1030
    %v1032 = vpop.f32.mrb[0].mxu0
    %v1033 = vpop.f32.mrb[0].mxu0
    %v1034 = vadd.f32 %v915, %v1033
    %v1035 = vpop.f32.mrb[0].mxu0
    %1036 = vmatprep.mubr.bf16.mxu0 0
    %1037 = vmatmul.mubr.bf16.gmra.mrb[0].mxu0 %v885
    %v1038 = vpop.f32.mrb[0].mxu0
    %v1039 = vadd.f32 %v915, %v1038
    %v1040 = vpop.f32.mrb[0].mxu0
    %v1041 = vpop.f32.mrb[0].mxu0
    %v1042 = vadd.f32 %v915, %v1041
    %v1043 = vpop.f32.mrb[0].mxu0
    %1044 = vmatprep.mubr.bf16.mxu0 0
    %1045 = vmatmul.mubr.bf16.gmra.mrb[0].mxu0 %v886
    %v1046 = vpop.f32.mrb[0].mxu0
    %v1047 = vadd.f32 %v915, %v1046
    %v1048 = vpop.f32.mrb[0].mxu0
    %v1049 = vpop.f32.mrb[0].mxu0
    %v1050 = vadd.f32 %v915, %v1049
    %v1051 = vpop.f32.mrb[0].mxu0
    %1052 = vmatprep.mubr.bf16.mxu0 0
    %1053 = vmatmul.mubr.bf16.gmra.mrb[0].mxu0 %v887
    %v1054 = vpop.f32.mrb[0].mxu0
    %v1055 = vadd.f32 %v915, %v1054
    %v1056 = vpop.f32.mrb[0].mxu0
    %v1057 = vpop.f32.mrb[0].mxu0
    %v1058 = vadd.f32 %v915, %v1057
    %v1059 = vpop.f32.mrb[0].mxu0
    %1060 = vmatprep.mubr.bf16.mxu0 0
    %1061 = vmatmul.mubr.bf16.gmra.mrb[0].mxu0 %v888
    %v1062 = vpop.f32.mrb[0].mxu0
    %v1063 = vadd.f32 %v915, %v1062
    %v1064 = vpop.f32.mrb[0].mxu0
    %v1065 = vpop.f32.mrb[0].mxu0
    %v1066 = vadd.f32 %v915, %v1065
    %v1067 = vpop.f32.mrb[0].mxu0
    %1068 = vmatprep.mubr.bf16.mxu0 0
    %1069 = vmatmul.mubr.bf16.gmra.mrb[0].mxu0 %v889
    %v1070 = vpop.f32.mrb[0].mxu0
    %v1071 = vadd.f32 %v915, %v1070
    %v1072 = vpop.f32.mrb[0].mxu0
    %v1073 = vpop.f32.mrb[0].mxu0
    %v1074 = vadd.f32 %v915, %v1073
    %v1075 = vpop.f32.mrb[0].mxu0
    %1076 = vmatprep.mubr.bf16.mxu0 0
    %1077 = vmatmul.mubr.bf16.gmra.mrb[0].mxu0 %v890
    %v1078 = vpop.f32.mrb[0].mxu0
    %v1079 = vadd.f32 %v915, %v1078
    %v1080 = vpop.f32.mrb[0].mxu0
    %v1081 = vpop.f32.mrb[0].mxu0
    %v1082 = vadd.f32 %v915, %v1081
    %v1083 = vpop.f32.mrb[0].mxu0
    %1084 = vmatprep.mubr.bf16.mxu0 0
    %1085 = vmatmul.mubr.bf16.gmra.mrb[0].mxu0 %v891
    %v1086 = vpop.f32.mrb[0].mxu0
    %v1087 = vadd.f32 %v915, %v1086
    %v1088 = vpop.f32.mrb[0].mxu0
    %v1089 = vpop.f32.mrb[0].mxu0
    %v1090 = vadd.f32 %v915, %v1089
    %v1091 = vpop.f32.mrb[0].mxu0
    %1092 = vmatprep.mubr.bf16.mxu0 0
    %1093 = vmatmul.mubr.bf16.gmra.mrb[0].mxu0 %v892
    %v1094 = vpop.f32.mrb[0].mxu0
    %v1095 = vadd.f32 %v915, %v1094
    %v1096 = vpop.f32.mrb[0].mxu0
    %v1097 = vpop.f32.mrb[0].mxu0
    %v1098 = vadd.f32 %v915, %v1097
    %v1099 = vpop.f32.mrb[0].mxu0
    %1100 = vmatprep.mubr.bf16.mxu0 0
    %1101 = vmatmul.mubr.bf16.gmra.mrb[0].mxu0 %v893
    %v1102 = vpop.f32.mrb[0].mxu0
    %v1103 = vadd.f32 %v915, %v1102
    %v1104 = vpop.f32.mrb[0].mxu0
    %v1105 = vpop.f32.mrb[0].mxu0
    %v1106 = vadd.f32 %v915, %v1105
    %v1107 = vpop.f32.mrb[0].mxu0
    %1108 = vmatprep.mubr.bf16.mxu0 0
    %1109 = vmatmul.mubr.bf16.gmra.mrb[0].mxu0 %v894
    %v1110 = vpop.f32.mrb[0].mxu0
    %v1111 = vadd.f32 %v915, %v1110
    %v1112 = vpop.f32.mrb[0].mxu0
    %v1113 = vpop.f32.mrb[0].mxu0
    %v1114 = vadd.f32 %v915, %v1113
    %v1115 = vpop.f32.mrb[0].mxu0
    %1116 = vmatprep.mubr.bf16.mxu0 0
    %1117 = vmatmul.mubr.bf16.gmra.mrb[0].mxu0 %v895
    %v1118 = vpop.f32.mrb[0].mxu0
    %v1119 = vadd.f32 %v915, %v1118
    %v1120 = vpop.f32.mrb[0].mxu0
    %v1121 = vpop.f32.mrb[0].mxu0
    %v1122 = vadd.f32 %v915, %v1121
    %v1123 = vpop.f32.mrb[0].mxu0
    %1124 = vdwg.mxu0
    %1125 = vst [vmem:[#allocation2] sm:$0xff] %v999
    %1126 = vst [vmem:[#allocation2 + $0x8] sm:$0xff] %v1002
    %1127 = vst [vmem:[#allocation2 + $0x10] sm:$0xff] %v1007
    %1128 = vst [vmem:[#allocation2 + $0x18] sm:$0xff] %v1010
    %1129 = vst [vmem:[#allocation2 + $0x20] sm:$0xff] %v1015
    %1130 = vst [vmem:[#allocation2 + $0x28] sm:$0xff] %v1018
    %1131 = vst [vmem:[#allocation2 + $0x30] sm:$0xff] %v1023
    %1132 = vst [vmem:[#allocation2 + $0x38] sm:$0xff] %v1026
    %1133 = vst [vmem:[#allocation2 + $0x40] sm:$0xff] %v1031
    %1134 = vst [vmem:[#allocation2 + $0x48] sm:$0xff] %v1034
    %1135 = vst [vmem:[#allocation2 + $0x50] sm:$0xff] %v1039
    %1136 = vst [vmem:[#allocation2 + $0x58] sm:$0xff] %v1042
    %1137 = vst [vmem:[#allocation2 + $0x60] sm:$0xff] %v1047
    %1138 = vst [vmem:[#allocation2 + $0x68] sm:$0xff] %v1050
    %1139 = vst [vmem:[#allocation2 + $0x70] sm:$0xff] %v1055
    %1140 = vst [vmem:[#allocation2 + $0x78] sm:$0xff] %v1058
    %1141 = vst [vmem:[#allocation2 + $0x80] sm:$0xff] %v1063
    %1142 = vst [vmem:[#allocation2 + $0x88] sm:$0xff] %v1066
    %1143 = vst [vmem:[#allocation2 + $0x90] sm:$0xff] %v1071
    %1144 = vst [vmem:[#allocation2 + $0x98] sm:$0xff] %v1074
    %1145 = vst [vmem:[#allocation2 + $0xa0] sm:$0xff] %v1079
    %1146 = vst [vmem:[#allocation2 + $0xa8] sm:$0xff] %v1082
    %1147 = vst [vmem:[#allocation2 + $0xb0] sm:$0xff] %v1087
    %1148 = vst [vmem:[#allocation2 + $0xb8] sm:$0xff] %v1090
    %1149 = vst [vmem:[#allocation2 + $0xc0] sm:$0xff] %v1095
    %1150 = vst [vmem:[#allocation2 + $0xc8] sm:$0xff] %v1098
    %1151 = vst [vmem:[#allocation2 + $0xd0] sm:$0xff] %v1103
    %1152 = vst [vmem:[#allocation2 + $0xd8] sm:$0xff] %v1106
    %1153 = vst [vmem:[#allocation2 + $0xe0] sm:$0xff] %v1111
    %1154 = vst [vmem:[#allocation2 + $0xe8] sm:$0xff] %v1114
    %1155 = vst [vmem:[#allocation2 + $0xf0] sm:$0xff] %v1119
    %1156 = vst [vmem:[#allocation2 + $0xf8] sm:$0xff] %v1122
    // Predicated region
    $region18: #{tpu_custom_call.1} parent=1 // pred_check
      _
    $region19: #{tpu_custom_call.1} parent=1 // pred_check_branch
      %1158 = sbr.rel (0) target = $region21
    $region20: #{tpu_custom_call.1} parent=1 // pred_region
      %s1160 = ssub.s32 4096, 4096
      %1161 = vsyncadd [#allocation3], %s1160
      %s1162 = sshll.u32 [#allocation2], 4
      %s1163 = int_to_ptr.vmem [resolvable:$true] %s1162
      %1168 = dma.vmem_to_hbm [thread:$0]  %s1163, 4096, %s4, [#allocation3], 128, 128, 8
    $region21: #{tpu_custom_call.1} parent=1 // pred_fallthru
      _
    // Predicated region
    $region22: #{tpu_custom_call.1} parent=1 // pred_check
      _
    $region23: #{tpu_custom_call.1} parent=1 // pred_check_branch
      %1170 = sbr.rel (0) target = $region25
    $region24: #{tpu_custom_call.1} parent=1 // pred_region
      %1171 = dma.done [#allocation3], 4096
    $region25: #{tpu_custom_call.1} parent=1 // pred_fallthru
      _
    %1172 = vsyncpa [#allocation3], 1

</llo_original>
